<compile_context>
chip_gen: v7x
topology: tpu7x:2x2x1
jax: 0.10.0
libtpu: 0.0.40
codegen_flags: <defaults>
</compile_context>

<pallas_src>
import functools

import jax
import jax.numpy as jnp
from jax.experimental import pallas as pl
from jax.experimental.pallas import tpu as pltpu


def _series_decomp_kernel(a_ref, x_ref, res_ref, mm_ref, *, inv_k):
    """a_ref: (lt, L) window-count matrix (f32).
    x_ref: (1, L, ct).  res_ref / mm_ref: (1, lt, ct)."""
    xf = x_ref[0].astype(jnp.float32)                                  # (L, ct)
    mm = jnp.dot(a_ref[...], xf, preferred_element_type=jnp.float32) * inv_k
    lt = mm_ref.shape[1]
    L = xf.shape[0]
    if lt == L:
        x_rows = xf
    else:
        l0 = pl.multiple_of(pl.program_id(2) * lt, 8)
        x_rows = x_ref[0, pl.ds(l0, lt), :].astype(jnp.float32)
    mm_ref[0] = mm.astype(mm_ref.dtype)
    res_ref[0] = (x_rows - mm).astype(res_ref.dtype)


def _pick_tiles(L, Cp, B):
    """Pick (channel_tile, L_row_tile) for lane-dense, VMEM-friendly blocks."""
    # Channel tile: largest multiple-of-128 divisor of Cp keeping the
    # (L, ct) f32 x-slab under ~2 MiB (safe headroom on every generation).
    x_slab = 2 << 20
    ct = 128
    d = 128
    while d <= Cp:
        if Cp % d == 0 and L * d * 4 <= x_slab:
            ct = d
        d += 128

    # Row tile for the banded matrix A: full L if (L, L) f32 fits ~4 MiB,
    # else the largest multiple-of-8 divisor of L under that budget.
    a_budget = 4 << 20
    if L * L * 4 <= a_budget:
        lt = L
    else:
        lt = None
        cap = max(8, a_budget // (L * 4))
        for cand in range(min(L, cap), 7, -1):
            if L % cand == 0 and cand % 8 == 0:
                lt = cand
                break
        if lt is None:
            lt = L  # TODO(synk): tile the A contraction dim for very long prime L.

    # Guarantee >= 2 grid steps so v7x's second TensorCore isn't idle.
    if B * (Cp // ct) * (L // lt) < 2 and Cp >= 256:
        ct = 128
    return ct, lt


def series_decomp(x, kernel_size):
    """x: (B, L, C). Returns (res, moving_mean), both (B, L, C)."""
    assert kernel_size % 2 == 1, "series_decomp assumes an odd kernel_size"
    B, L, C = x.shape
    p = (kernel_size - 1) // 2

    # Lane-dense outputs: pad channels up to a multiple of 128.
    Cp = max(128, ((C + 127) // 128) * 128)
    x_p = jnp.pad(x, ((0, 0), (0, 0), (0, Cp - C))) if Cp != C else x

    # Banded replicate-padded AvgPool1d as an (L, L) count matrix (MXU path).
    idx = jnp.arange(L)
    pos = jnp.clip(idx[:, None] + jnp.arange(-p, p + 1)[None, :], 0, L - 1)
    a = jnp.zeros((L, L), jnp.float32).at[idx[:, None], pos].add(1.0)

    ct, lt = _pick_tiles(L, Cp, B)
    grid = (B, Cp // ct, L // lt)

    kernel = functools.partial(_series_decomp_kernel, inv_k=1.0 / kernel_size)

    a_spec = pl.BlockSpec((lt, L), lambda b, j, l: (l, 0))
    x_spec = pl.BlockSpec((1, L, ct), lambda b, j, l: (b, 0, j))
    o_spec = pl.BlockSpec((1, lt, ct), lambda b, j, l: (b, l, j))

    # Double-buffered footprint: A block + x block + 2 output blocks.
    blk_bytes = (lt * L + L * ct + 2 * lt * ct) * 4
    vmem_limit = min(max(2 * blk_bytes + (4 << 20), 16 << 20), 60 << 20)

    res_p, mm_p = pl.pallas_call(
        kernel,
        out_shape=(
            jax.ShapeDtypeStruct((B, L, Cp), x.dtype),   # res
            jax.ShapeDtypeStruct((B, L, Cp), x.dtype),   # moving_mean
        ),
        grid_spec=pltpu.PrefetchScalarGridSpec(
            num_scalar_prefetch=0,
            grid=grid,
            in_specs=[a_spec, x_spec],
            out_specs=[o_spec, o_spec],
        ),
        compiler_params=pltpu.CompilerParams(
            dimension_semantics=("parallel", "parallel", "parallel"),
            vmem_limit_bytes=vmem_limit,
        ),
    )(a, x_p)

    if Cp != C:
        res_p = res_p[:, :, :C]
        mm_p = mm_p[:, :, :C]
    return res_p, mm_p


def _reference(x, kernel_size):
    """Pure-JAX reference mirroring the PyTorch module exactly."""
    B, L, C = x.shape
    p = (kernel_size - 1) // 2
    front = jnp.repeat(x[:, 0:1, :], p, axis=1)
    end = jnp.repeat(x[:, -1:, :], p, axis=1)
    xp = jnp.concatenate([front, x, end], axis=1)            # (B, L+2p, C)
    mm = jnp.stack([xp[:, j:j + L, :] for j in range(kernel_size)],
                   axis=0).mean(axis=0)
    return x - mm, mm


if __name__ == "__main__":
    KERNEL_SIZE = 25                  # FEDformer/Autoformer default moving_avg
    B, L, C = 2, 96, 32               # batch, seq len, channels

    key = jax.random.PRNGKey(0)
    x = jax.random.normal(key, (B, L, C), dtype=jnp.float32)

    res, mm = series_decomp(x, KERNEL_SIZE)
    jax.block_until_ready((res, mm))

    res_ref, mm_ref = _reference(x, KERNEL_SIZE)
    assert jnp.allclose(mm, mm_ref, atol=1e-5, rtol=1e-5), "moving_mean mismatch"
    assert jnp.allclose(res, res_ref, atol=1e-5, rtol=1e-5), "res mismatch"

    print("KERNEL_OK")
</pallas_src>

<mosaic_0001>
module attributes {stable_mosaic.version = 11 : i64} {
  func.func @_series_decomp_kernel(%arg0: i32, %arg1: i32, %arg2: i32, %arg3: memref<96x96xf32, #tpu.memory_space<vmem>>, %arg4: memref<1x96x128xf32, #tpu.memory_space<vmem>>, %arg5: memref<1x96x128xf32, #tpu.memory_space<vmem>>, %arg6: memref<1x96x128xf32, #tpu.memory_space<vmem>>) attributes {dimension_semantics = [#tpu.dimension_semantics<parallel>, #tpu.dimension_semantics<parallel>, #tpu.dimension_semantics<parallel>], iteration_bounds = array<i64: 2, 1, 1>, scalar_prefetch = 0 : i64, scratch_operands = 0 : i64, tpu.core_type = #tpu.core_type<tc>, window_params = [{transform_indices = @transform_0, window_bounds = array<i64: 96, 96>}, {transform_indices = @transform_1, window_bounds = array<i64: 1, 96, 128>}, {transform_indices = @transform_2, window_bounds = array<i64: 1, 96, 128>}, {transform_indices = @transform_3, window_bounds = array<i64: 1, 96, 128>}]} {
    %c0 = arith.constant 0 : index
    %c0_0 = arith.constant 0 : index
    %c0_1 = arith.constant 0 : index
    %0 = vector.load %arg4[%c0, %c0_0, %c0_1] : memref<1x96x128xf32, #tpu.memory_space<vmem>>, vector<1x96x128xf32>
    %1 = vector.shape_cast %0 : vector<1x96x128xf32> to vector<96x128xf32>
    %c0_2 = arith.constant 0 : index
    %c0_3 = arith.constant 0 : index
    %2 = vector.load %arg3[%c0_2, %c0_3] : memref<96x96xf32, #tpu.memory_space<vmem>>, vector<96x96xf32>
    %cst = arith.constant dense<0.000000e+00> : vector<96x128xf32>
    %3 = tpu.matmul %2, %1, %cst {dimension_numbers = #tpu.dot_dimension_numbers<[1], [0], [0], [1], [0, 0, 1, 1], [], []>} : vector<96x96xf32>, vector<96x128xf32>, vector<96x128xf32> -> vector<96x128xf32>
    %cst_4 = arith.constant 4.000000e-02 : f32
    %4 = vector.broadcast %cst_4 : f32 to vector<96x128xf32>
    %5 = arith.mulf %3, %4 : vector<96x128xf32>
    %c0_5 = arith.constant 0 : index
    %c0_6 = arith.constant 0 : index
    %c0_7 = arith.constant 0 : index
    %6 = vector.load %arg6[%c0_5, %c0_6, %c0_7] : memref<1x96x128xf32, #tpu.memory_space<vmem>>, vector<1x96x128xf32>
    %7 = vector.shape_cast %6 : vector<1x96x128xf32> to vector<96x128xf32>
    %8 = vector.shape_cast %5 : vector<96x128xf32> to vector<1x96x128xf32>
    tpu.vector_store %arg6[%c0_5, %c0_6, %c0_7], %8 {strides = array<i32>} : memref<1x96x128xf32, #tpu.memory_space<vmem>>, vector<1x96x128xf32>,
    %9 = arith.subf %1, %5 : vector<96x128xf32>
    %c0_8 = arith.constant 0 : index
    %c0_9 = arith.constant 0 : index
    %c0_10 = arith.constant 0 : index
    %10 = vector.load %arg5[%c0_8, %c0_9, %c0_10] : memref<1x96x128xf32, #tpu.memory_space<vmem>>, vector<1x96x128xf32>
    %11 = vector.shape_cast %10 : vector<1x96x128xf32> to vector<96x128xf32>
    %12 = vector.shape_cast %9 : vector<96x128xf32> to vector<1x96x128xf32>
    tpu.vector_store %arg5[%c0_8, %c0_9, %c0_10], %12 {strides = array<i32>} : memref<1x96x128xf32, #tpu.memory_space<vmem>>, vector<1x96x128xf32>,
    return
  }
  func.func @transform_0(%arg0: i32, %arg1: i32, %arg2: i32) -> (i32, i32) {
    %c0_i32 = arith.constant 0 : i32
    %c0_i32_0 = arith.constant 0 : i32
    return %arg2, %c0_i32 : i32, i32
  }
  func.func @transform_1(%arg0: i32, %arg1: i32, %arg2: i32) -> (i32, i32, i32) {
    %c0_i32 = arith.constant 0 : i32
    %c0_i32_0 = arith.constant 0 : i32
    return %arg0, %c0_i32, %arg1 : i32, i32, i32
  }
  func.func @transform_2(%arg0: i32, %arg1: i32, %arg2: i32) -> (i32, i32, i32) {
    %c0_i32 = arith.constant 0 : i32
    return %arg0, %arg2, %arg1 : i32, i32, i32
  }
  func.func @transform_3(%arg0: i32, %arg1: i32, %arg2: i32) -> (i32, i32, i32) {
    %c0_i32 = arith.constant 0 : i32
    return %arg0, %arg2, %arg1 : i32, i32, i32
  }
}

</mosaic_0001>

<llo_original>
// kernel: tpu_custom_call.1
$region0: #{tpu_custom_call.1}
  #allocation0 [shape = 'u32[]', space=smem, size = 0x4, offset = 0x4, fixed_abs, tag = 'smem constant byte address 0x4 - core index']
  #allocation1 [shape = 'u32[144,128]{1,0:T(1,128)}', space=vmem, size = 0x12000, scoped, tag = 'internal scratch']
  %s0 = inlined_call_operand.hbm [shape: f32[96,96], index: 0, kind: input, shape index: {}]
  %s1 = inlined_call_operand.hbm [shape: f32[2,96,128], index: 1, kind: input, shape index: {}]
  %s2 = inlined_call_operand.hbm [shape: f32[2,96,128], index: 2, kind: output, shape index: {0}]
  %s3 = inlined_call_operand.hbm [shape: f32[2,96,128], index: 3, kind: output, shape index: {1}]
  %4 = xla_tuple %s2, %s3
  %s5 = sld [smem:[#allocation0]]
  $region57: #{tpu_custom_call.1} parent=0
    _
  %s7 = ssub.s32 1, %s5
  %s8 = scalar_select 0, %s7, %s5
  $region1: #{tpu_custom_call.1} parent=0
    #allocation2 [shape = 'u8[49152]{0}', space=vmem, size = 0xc000, scoped, tag = 'input window, operand 0, single buffered']
    #allocation3 [shape = 's32[2]{0}', space=sflag, size = 0x8, scoped, tag = 'scoped memory for tpu_custom_call.1']
    #allocation4 [shape = 's32[2]{0}', space=sflag, size = 0x8, scoped, tag = 'scoped memory for tpu_custom_call.1']
    #allocation5 [shape = 'u8[98304]{0}', space=vmem, size = 0x18000, scoped, tag = 'input window, operand 1']
    #allocation6 [shape = 's32[2]{0}', space=sflag, size = 0x8, scoped, tag = 'scoped memory for tpu_custom_call.1']
    #allocation7 [shape = 'u8[98304]{0}', space=vmem, size = 0x18000, scoped, tag = 'output window, operand 0']
    #allocation8 [shape = 'u8[98304]{0}', space=vmem, size = 0x18000, scoped, tag = 'output window, operand 1']
    #allocation9 [shape = 's32[2]{0}', space=sflag, size = 0x8, scoped, tag = 'scoped memory for tpu_custom_call.1']
    %9 = vsyncpa [#allocation3], 0
    %10 = vsyncpa [#allocation6], 0
    %s11 = scalar_lea.sflag [#allocation6], 1
    %12 = vsyncpa %s11, 0
    %13 = vsyncpa [#allocation4], 0
    %s14 = scalar_lea.sflag [#allocation4], 1
    %15 = vsyncpa %s14, 0
    %16 = vsyncpa [#allocation9], 0
    %s17 = scalar_lea.sflag [#allocation9], 1
    %18 = vsyncpa %s17, 0
    loop: start=0, step=1, limit=4
    $region2: #{tpu_custom_call.1} parent=1 // loop_pre_header
      _
    $region3: #{tpu_custom_call.1} parent=1 // loop_header
      %s20 = sphi 0, %s24
      %p21 = scmp.ge.s32.totalorder %s20, 4
      %s27 = sphi 0, %s46
      %s28 = sphi 0, %s42
      %s29 = sphi 0, %s38
      %s30 = sphi 0, %s27
      %s31 = sphi 0, %s28
      %s32 = sphi 0, %s29
      %s33 = sphi 0, %s30
      %s34 = sphi 0, %s31
      %s35 = sphi 0, %s32
      %s49 = sphi 0, %s51
      %s52 = sphi 0, %s49
      %s53 = sphi 0, %s52
      %s69 = sphi 0, %s53
      %s77 = sphi 0, %s79
      %s80 = sphi 0, %s77
      %s81 = sphi 0, %s80
      %s97 = sphi 0, %s81
      %s107 = sphi 0, %s109
      %s110 = sphi 0, %s107
      %s111 = sphi 0, %s110
      %s127 = sphi 0, %s111
      %s137 = sphi 0, %s139
      %s140 = sphi 0, %s137
      %s141 = sphi 0, %s140
      %s157 = sphi 0, %s141
    $region4: #{tpu_custom_call.1} parent=1 // loop_header_branch
      %23 = sbr.rel (%p21) target = $region8
    $region5: #{tpu_custom_call.1} parent=1 // loop_body
      %s25 = ssub.s32 %s20, 1
      %s26 = ssub.s32 %s20, 2
      %s36 = sadd.s32 1, %s29
      %p37 = scmp.ge.s32.totalorder %s36, 1
      %s38 = scalar_select %p37, 0, %s36
      %s39 = sadd.s32 1, %s28
      %s40 = scalar_select %p37, %s39, %s28
      %p41 = scmp.ge.s32.totalorder %s40, 1
      %s42 = scalar_select %p41, 0, %s40
      %s43 = sadd.s32 1, %s27
      %s44 = scalar_select %p41, %s43, %s27
      %p45 = scmp.ge.s32.totalorder %s44, 2
      %s46 = scalar_select %p45, 0, %s44
      %s47 = ssub.s32 %s29, %s38
      %p48 = scmp.eq.s32.totalorder %s47, 0
      %s50 = sadd.s32 %s49, 1
      %s51 = scalar_select %p48, %s49, %s50
      %p54 = pneg %p48
      %p55 = scmp.eq.s32.totalorder %s20, 1
      %p56 = por %p54, %p55
      %p57 = scmp.ne.s32.totalorder %s49, %s52
      %p58 = scmp.eq.s32.totalorder %s20, 0
      %p59 = por %p57, %p58
      %p60 = scmp.ne.s32.totalorder %s49, %s52
      %p61 = scmp.eq.s32.totalorder %s25, 1
      %p62 = por %p60, %p61
      %p63 = scmp.ne.s32.totalorder %s52, %s53
      %p64 = scmp.eq.s32.totalorder %s25, 0
      %p65 = por %p63, %p64
      %p66 = scmp.ne.s32.totalorder %s52, %s53
      %p67 = scmp.eq.s32.totalorder %s26, 1
      %p68 = por %p66, %p67
      %p70 = scmp.ne.s32.totalorder %s53, %s69
      %p71 = scmp.eq.s32.totalorder %s26, 0
      %p72 = por %p70, %p71
      %s73 = ssub.s32 %s27, %s46
      %s74 = ssub.s32 %s28, %s42
      %s75 = sor.u32 %s73, %s74
      %p76 = scmp.eq.s32.totalorder %s75, 0
      %s78 = sadd.s32 %s77, 1
      %s79 = scalar_select %p76, %s77, %s78
      %p82 = pneg %p76
      %p83 = scmp.eq.s32.totalorder %s20, 1
      %p84 = por %p82, %p83
      %p85 = scmp.ne.s32.totalorder %s77, %s80
      %p86 = scmp.eq.s32.totalorder %s20, 0
      %p87 = por %p85, %p86
      %p88 = scmp.ne.s32.totalorder %s77, %s80
      %p89 = scmp.eq.s32.totalorder %s25, 1
      %p90 = por %p88, %p89
      %p91 = scmp.ne.s32.totalorder %s80, %s81
      %p92 = scmp.eq.s32.totalorder %s25, 0
      %p93 = por %p91, %p92
      %p94 = scmp.ne.s32.totalorder %s80, %s81
      %p95 = scmp.eq.s32.totalorder %s26, 1
      %p96 = por %p94, %p95
      %p98 = scmp.ne.s32.totalorder %s81, %s97
      %p99 = scmp.eq.s32.totalorder %s26, 0
      %p100 = por %p98, %p99
      %s101 = ssub.s32 %s27, %s46
      %s102 = ssub.s32 %s29, %s38
      %s103 = sor.u32 %s101, %s102
      %s104 = ssub.s32 %s28, %s42
      %s105 = sor.u32 %s103, %s104
      %p106 = scmp.eq.s32.totalorder %s105, 0
      %s108 = sadd.s32 %s107, 1
      %s109 = scalar_select %p106, %s107, %s108
      %p112 = pneg %p106
      %p113 = scmp.eq.s32.totalorder %s20, 1
      %p114 = por %p112, %p113
      %p115 = scmp.ne.s32.totalorder %s107, %s110
      %p116 = scmp.eq.s32.totalorder %s20, 0
      %p117 = por %p115, %p116
      %p118 = scmp.ne.s32.totalorder %s107, %s110
      %p119 = scmp.eq.s32.totalorder %s25, 1
      %p120 = por %p118, %p119
      %p121 = scmp.ne.s32.totalorder %s110, %s111
      %p122 = scmp.eq.s32.totalorder %s25, 0
      %p123 = por %p121, %p122
      %p124 = scmp.ne.s32.totalorder %s110, %s111
      %p125 = scmp.eq.s32.totalorder %s26, 1
      %p126 = por %p124, %p125
      %p128 = scmp.ne.s32.totalorder %s111, %s127
      %p129 = scmp.eq.s32.totalorder %s26, 0
      %p130 = por %p128, %p129
      %s131 = ssub.s32 %s27, %s46
      %s132 = ssub.s32 %s29, %s38
      %s133 = sor.u32 %s131, %s132
      %s134 = ssub.s32 %s28, %s42
      %s135 = sor.u32 %s133, %s134
      %p136 = scmp.eq.s32.totalorder %s135, 0
      %s138 = sadd.s32 %s137, 1
      %s139 = scalar_select %p136, %s137, %s138
      %p142 = pneg %p136
      %p143 = scmp.eq.s32.totalorder %s20, 1
      %p144 = por %p142, %p143
      %p145 = scmp.ne.s32.totalorder %s137, %s140
      %p146 = scmp.eq.s32.totalorder %s20, 0
      %p147 = por %p145, %p146
      %p148 = scmp.ne.s32.totalorder %s137, %s140
      %p149 = scmp.eq.s32.totalorder %s25, 1
      %p150 = por %p148, %p149
      %p151 = scmp.ne.s32.totalorder %s140, %s141
      %p152 = scmp.eq.s32.totalorder %s25, 0
      %p153 = por %p151, %p152
      %p154 = scmp.ne.s32.totalorder %s140, %s141
      %p155 = scmp.eq.s32.totalorder %s26, 1
      %p156 = por %p154, %p155
      %p158 = scmp.ne.s32.totalorder %s141, %s157
      %p159 = scmp.eq.s32.totalorder %s26, 0
      %p160 = por %p158, %p159
      %p161 = scmp.le.s32.totalorder 1, %s20
      %p162 = scmp.lt.s32.totalorder %s20, 3
      %p163 = pnand %p161, %p162
      %p164 = pneg %p163
      // Predicated region
      $region9: #{tpu_custom_call.1} parent=5 // pred_check
        _
      $region10: #{tpu_custom_call.1} parent=5 // pred_check_branch
        %166 = sbr.rel (%p163) target = $region12
      $region11: #{tpu_custom_call.1} parent=5 // pred_region
        %s167 = ssub.s32 %s20, 1
        // Predicated region
        $region13: #{tpu_custom_call.1} parent=11 // pred_check
          %p168 = pneg %p65
        $region14: #{tpu_custom_call.1} parent=11 // pred_check_branch
          %170 = sbr.rel (%p168) target = $region16
        $region15: #{tpu_custom_call.1} parent=11 // pred_region
          %s171 = smul.u32 12, %s32
          %s173 = ssub.s32 1536, 1536
          %174 = vsyncadd [#allocation3], %s173
          %s175 = smul.addr %s171, 128
          %s176 = scalar_lea.hbm %s0, %s175
          %s177 = sshll.u32 [#allocation2], 4
          %s178 = int_to_ptr.vmem [resolvable:$true] %s177
          %183 = dma.hbm_to_vmem [thread:$0]  %s176, 1536, %s178, [#allocation3], 128, 128, 8
        $region16: #{tpu_custom_call.1} parent=11 // pred_fallthru
          _
      $region12: #{tpu_custom_call.1} parent=5 // pred_fallthru
        _
      %p184 = scmp.lt.s32.totalorder %s20, 2
      // Predicated region
      $region17: #{tpu_custom_call.1} parent=5 // pred_check
        %p185 = pneg %p184
      $region18: #{tpu_custom_call.1} parent=5 // pred_check_branch
        %187 = sbr.rel (%p185) target = $region20
      $region19: #{tpu_custom_call.1} parent=5 // pred_region
        // Predicated region
        $region21: #{tpu_custom_call.1} parent=19 // pred_check
          %p188 = pneg %p87
        $region22: #{tpu_custom_call.1} parent=19 // pred_check_branch
          %190 = sbr.rel (%p188) target = $region24
        $region23: #{tpu_custom_call.1} parent=19 // pred_region
          %s191 = sand.u32 %s77, 1
          %s192 = scalar_lea.sflag [#allocation6], %s191
          %s193 = sand.u32 %s77, 1
          %s194 = smul.addr %s193, 96
          %s195 = scalar_lea.vmem [#allocation5], %s194
          %s197 = ssub.s32 1536, 1536
          %198 = vsyncadd %s192, %s197
          %s199 = smul.addr %s27, 12
          %s200 = sadd.s32 %s28, %s199
          %s201 = smul.addr %s200, 128
          %s202 = scalar_lea.hbm %s1, %s201
          %s203 = sshll.u32 %s195, 4
          %s204 = int_to_ptr.vmem [resolvable:$true] %s203
          %209 = dma.hbm_to_vmem [thread:$0]  %s202, 1536, %s204, %s192, 128, 128, 8
        $region24: #{tpu_custom_call.1} parent=19 // pred_fallthru
          _
      $region20: #{tpu_custom_call.1} parent=5 // pred_fallthru
        _
      %p210 = scmp.le.s32.totalorder 1, %s20
      %p211 = scmp.lt.s32.totalorder %s20, 3
      %p212 = pnand %p210, %p211
      %p213 = pneg %p212
      // Predicated region
      $region25: #{tpu_custom_call.1} parent=5 // pred_check
        _
      $region26: #{tpu_custom_call.1} parent=5 // pred_check_branch
        %215 = sbr.rel (%p212) target = $region28
      $region27: #{tpu_custom_call.1} parent=5 // pred_region
        %s216 = ssub.s32 %s20, 1
        // Predicated region
        $region29: #{tpu_custom_call.1} parent=27 // pred_check
          %p217 = pneg %p65
        $region30: #{tpu_custom_call.1} parent=27 // pred_check_branch
          %219 = sbr.rel (%p217) target = $region32
        $region31: #{tpu_custom_call.1} parent=27 // pred_region
          %220 = dma.done [#allocation3], 1536
        $region32: #{tpu_custom_call.1} parent=27 // pred_fallthru
          _
        %s221 = sand.u32 %s80, 1
        %s222 = scalar_lea.sflag [#allocation6], %s221
        %s223 = sand.u32 %s80, 1
        %s224 = smul.addr %s223, 96
        %s225 = scalar_lea.vmem [#allocation5], %s224
        // Predicated region
        $region33: #{tpu_custom_call.1} parent=27 // pred_check
          %p226 = pneg %p93
        $region34: #{tpu_custom_call.1} parent=27 // pred_check_branch
          %228 = sbr.rel (%p226) target = $region36
        $region35: #{tpu_custom_call.1} parent=27 // pred_region
          %229 = dma.done %s222, 1536
        $region36: #{tpu_custom_call.1} parent=27 // pred_fallthru
          _
        %p230 = pneg %p65
        %p231 = pneg %p62
        %s232 = sand.u32 %s80, 1
        %s233 = scalar_lea.sflag [#allocation6], %s232
        %s234 = sand.u32 %s80, 1
        %s235 = smul.addr %s234, 96
        %s236 = scalar_lea.vmem [#allocation5], %s235
        %p237 = pneg %p93
        %p238 = pneg %p90
        %p239 = pneg %p123
        %p240 = pneg %p120
        %s241 = sand.u32 %s110, 1
        %s242 = scalar_lea.sflag [#allocation4], %s241
        %s243 = sand.u32 %s110, 1
        %s244 = smul.addr %s243, 96
        %s245 = scalar_lea.vmem [#allocation7], %s244
        %p246 = pneg %p153
        %p247 = pneg %p150
        %s248 = sand.u32 %s140, 1
        %s249 = scalar_lea.sflag [#allocation9], %s248
        %s250 = sand.u32 %s140, 1
        %s251 = smul.addr %s250, 96
        %s252 = scalar_lea.vmem [#allocation8], %s251
        %s253 = smul.u32 12, %s32
        %s254 = smul.u32 12, %s32
        %s255 = smul.u32 12, %s32
        %v256 = vld [vmem:[%s225] sm:$0xff]
        %v257 = vld [vmem:[%s225 + $0x8] sm:$0xff]
        %v258 = vld [vmem:[%s225 + $0x10] sm:$0xff]
        %v259 = vld [vmem:[%s225 + $0x18] sm:$0xff]
        %v260 = vld [vmem:[%s225 + $0x20] sm:$0xff]
        %v261 = vld [vmem:[%s225 + $0x28] sm:$0xff]
        %v262 = vld [vmem:[%s225 + $0x30] sm:$0xff]
        %v263 = vld [vmem:[%s225 + $0x38] sm:$0xff]
        %v264 = vld [vmem:[%s225 + $0x40] sm:$0xff]
        %v265 = vld [vmem:[%s225 + $0x48] sm:$0xff]
        %v266 = vld [vmem:[%s225 + $0x50] sm:$0xff]
        %v267 = vld [vmem:[%s225 + $0x58] sm:$0xff]
        %v268 = vld [vmem:[#allocation2] sm:$0xff]
        %v269 = vld [vmem:[#allocation2 + $0x8] sm:$0xff]
        %v270 = vld [vmem:[#allocation2 + $0x10] sm:$0xff]
        %v271 = vld [vmem:[#allocation2 + $0x18] sm:$0xff]
        %v272 = vld [vmem:[#allocation2 + $0x20] sm:$0xff]
        %v273 = vld [vmem:[#allocation2 + $0x28] sm:$0xff]
        %v274 = vld [vmem:[#allocation2 + $0x30] sm:$0xff]
        %v275 = vld [vmem:[#allocation2 + $0x38] sm:$0xff]
        %v276 = vld [vmem:[#allocation2 + $0x40] sm:$0xff]
        %v277 = vld [vmem:[#allocation2 + $0x48] sm:$0xff]
        %v278 = vld [vmem:[#allocation2 + $0x50] sm:$0xff]
        %v279 = vld [vmem:[#allocation2 + $0x58] sm:$0xff]
        %vm280 = vcmask 785408
        %v282 = vsel %vm280, %v268, 0
        %v285 = vsel %vm280, %v269, 0
        %v288 = vsel %vm280, %v270, 0
        %v291 = vsel %vm280, %v271, 0
        %v294 = vsel %vm280, %v272, 0
        %v297 = vsel %vm280, %v273, 0
        %v300 = vsel %vm280, %v274, 0
        %v303 = vsel %vm280, %v275, 0
        %v306 = vsel %vm280, %v276, 0
        %v309 = vsel %vm280, %v277, 0
        %v312 = vsel %vm280, %v278, 0
        %v315 = vsel %vm280, %v279, 0
        %317 = vmatprep.subr.mxu0 0.0
        %318 = vmatpush1.msra.mxu0 %v256
        %319 = vmatprep.subr.mxu0 0.0
        %320 = vmatpush1.msra.mxu0 %v257
        %321 = vmatprep.subr.mxu0 0.0
        %322 = vmatpush1.msra.mxu0 %v258
        %323 = vmatprep.subr.mxu0 0.0
        %324 = vmatpush1.msra.mxu0 %v259
        %325 = vmatprep.subr.mxu0 0.0
        %326 = vmatpush1.msra.mxu0 %v260
        %327 = vmatprep.subr.mxu0 0.0
        %328 = vmatpush1.msra.mxu0 %v261
        %329 = vmatprep.subr.mxu0 0.0
        %330 = vmatpush1.msra.mxu0 %v262
        %331 = vmatprep.subr.mxu0 0.0
        %332 = vmatpush1.msra.mxu0 %v263
        %333 = vmatprep.subr.mxu0 0.0
        %334 = vmatpush1.msra.mxu0 %v264
        %335 = vmatprep.subr.mxu0 0.0
        %336 = vmatpush1.msra.mxu0 %v265
        %337 = vmatprep.subr.mxu0 0.0
        %338 = vmatpush1.msra.mxu0 %v266
        %339 = vmatprep.subr.mxu0 0.0
        %340 = vmatpush1.msra.mxu0 %v267
        %341 = vmatprep.subr.mxu0 0.0
        %342 = vmatpush1.msra.mxu0 0.0
        %343 = vmatprep.subr.mxu0 0.0
        %344 = vmatpush1.msra.mxu0 0.0
        %345 = vmatprep.subr.mxu0 0.0
        %346 = vmatpush1.msra.mxu0 0.0
        %347 = vmatprep.subr.mxu0 0.0
        %348 = vmatpush1.msra.mxu0 0.0
        %349 = vmatprep.subr.mxu0 0.0
        %350 = vmatpush1.msra.mxu0 0.0
        %351 = vmatprep.subr.mxu0 0.0
        %352 = vmatpush1.msra.mxu0 0.0
        %353 = vmatprep.subr.mxu0 0.0
        %354 = vmatpush1.msra.mxu0 0.0
        %355 = vmatprep.subr.mxu0 0.0
        %356 = vmatpush1.msra.mxu0 0.0
        %357 = vmatprep.subr.mxu0 0.0
        %358 = vmatpush1.msra.mxu0 0.0
        %359 = vmatprep.subr.mxu0 0.0
        %360 = vmatpush1.msra.mxu0 0.0
        %361 = vmatprep.subr.mxu0 0.0
        %362 = vmatpush1.msra.mxu0 0.0
        %363 = vmatprep.subr.mxu0 0.0
        %364 = vmatpush1.msra.mxu0 0.0
        %365 = vmatprep.subr.mxu0 0.0
        %366 = vmatpush1.msra.mxu0 0.0
        %367 = vmatprep.subr.mxu0 0.0
        %368 = vmatpush1.msra.mxu0 0.0
        %369 = vmatprep.subr.mxu0 0.0
        %370 = vmatpush1.msra.mxu0 0.0
        %371 = vmatprep.subr.mxu0 0.0
        %372 = vmatpush1.msra.mxu0 0.0
        %373 = vmatprep.subr.mxu0 0.0
        %374 = vmatpush1.msra.mxu0 0.0
        %375 = vmatprep.subr.mxu0 0.0
        %376 = vmatpush1.msra.mxu0 0.0
        %377 = vmatprep.subr.mxu0 0.0
        %378 = vmatpush1.msra.mxu0 0.0
        %379 = vmatprep.subr.mxu0 0.0
        %380 = vmatpush1.msra.mxu0 0.0
        %381 = vmatprep.mubr.f32.mxu0 0.0
        %382 = vmatmul.mubr.f32.gmra.mrb[0].mxu0 %v282
        %v383 = vpop.f32.mrb[0].mxu0
        %v384 = vadd.f32 0.0, %v383
        %v385 = vpop.f32.mrb[0].mxu0
        %386 = vmatprep.mubr.f32.mxu0 0.0
        %387 = vmatmul.mubr.f32.gmra.mrb[0].mxu0 %v285
        %v388 = vpop.f32.mrb[0].mxu0
        %v389 = vadd.f32 0.0, %v388
        %v390 = vpop.f32.mrb[0].mxu0
        %391 = vmatprep.mubr.f32.mxu0 0.0
        %392 = vmatmul.mubr.f32.gmra.mrb[0].mxu0 %v288
        %v393 = vpop.f32.mrb[0].mxu0
        %v394 = vadd.f32 0.0, %v393
        %v395 = vpop.f32.mrb[0].mxu0
        %396 = vmatprep.mubr.f32.mxu0 0.0
        %397 = vmatmul.mubr.f32.gmra.mrb[0].mxu0 %v291
        %v398 = vpop.f32.mrb[0].mxu0
        %v399 = vadd.f32 0.0, %v398
        %v400 = vpop.f32.mrb[0].mxu0
        %401 = vmatprep.mubr.f32.mxu0 0.0
        %402 = vmatmul.mubr.f32.gmra.mrb[0].mxu0 %v294
        %v403 = vpop.f32.mrb[0].mxu0
        %v404 = vadd.f32 0.0, %v403
        %v405 = vpop.f32.mrb[0].mxu0
        %406 = vmatprep.mubr.f32.mxu0 0.0
        %407 = vmatmul.mubr.f32.gmra.mrb[0].mxu0 %v297
        %v408 = vpop.f32.mrb[0].mxu0
        %v409 = vadd.f32 0.0, %v408
        %v410 = vpop.f32.mrb[0].mxu0
        %411 = vmatprep.mubr.f32.mxu0 0.0
        %412 = vmatmul.mubr.f32.gmra.mrb[0].mxu0 %v300
        %v413 = vpop.f32.mrb[0].mxu0
        %v414 = vadd.f32 0.0, %v413
        %v415 = vpop.f32.mrb[0].mxu0
        %416 = vmatprep.mubr.f32.mxu0 0.0
        %417 = vmatmul.mubr.f32.gmra.mrb[0].mxu0 %v303
        %v418 = vpop.f32.mrb[0].mxu0
        %v419 = vadd.f32 0.0, %v418
        %v420 = vpop.f32.mrb[0].mxu0
        %421 = vmatprep.mubr.f32.mxu0 0.0
        %422 = vmatmul.mubr.f32.gmra.mrb[0].mxu0 %v306
        %v423 = vpop.f32.mrb[0].mxu0
        %v424 = vadd.f32 0.0, %v423
        %v425 = vpop.f32.mrb[0].mxu0
        %426 = vmatprep.mubr.f32.mxu0 0.0
        %427 = vmatmul.mubr.f32.gmra.mrb[0].mxu0 %v309
        %v428 = vpop.f32.mrb[0].mxu0
        %v429 = vadd.f32 0.0, %v428
        %v430 = vpop.f32.mrb[0].mxu0
        %431 = vmatprep.mubr.f32.mxu0 0.0
        %432 = vmatmul.mubr.f32.gmra.mrb[0].mxu0 %v312
        %v433 = vpop.f32.mrb[0].mxu0
        %v434 = vadd.f32 0.0, %v433
        %v435 = vpop.f32.mrb[0].mxu0
        %436 = vmatprep.mubr.f32.mxu0 0.0
        %437 = vmatmul.mubr.f32.gmra.mrb[0].mxu0 %v315
        %v438 = vpop.f32.mrb[0].mxu0
        %v439 = vadd.f32 0.0, %v438
        %v440 = vpop.f32.mrb[0].mxu0
        %441 = vdwg.mxu0
        %v442 = vmul.f32 %v384, 0.04
        %v443 = vmul.f32 %v389, 0.04
        %v444 = vmul.f32 %v394, 0.04
        %v445 = vmul.f32 %v399, 0.04
        %v446 = vmul.f32 %v404, 0.04
        %v447 = vmul.f32 %v409, 0.04
        %v448 = vmul.f32 %v414, 0.04
        %v449 = vmul.f32 %v419, 0.04
        %v450 = vmul.f32 %v424, 0.04
        %v451 = vmul.f32 %v429, 0.04
        %v452 = vmul.f32 %v434, 0.04
        %v453 = vmul.f32 %v439, 0.04
        %454 = vst [vmem:[%s252] sm:$0xff] %v442
        %455 = vst [vmem:[%s252 + $0x8] sm:$0xff] %v443
        %456 = vst [vmem:[%s252 + $0x10] sm:$0xff] %v444
        %457 = vst [vmem:[%s252 + $0x18] sm:$0xff] %v445
        %458 = vst [vmem:[%s252 + $0x20] sm:$0xff] %v446
        %459 = vst [vmem:[%s252 + $0x28] sm:$0xff] %v447
        %460 = vst [vmem:[%s252 + $0x30] sm:$0xff] %v448
        %461 = vst [vmem:[%s252 + $0x38] sm:$0xff] %v449
        %462 = vst [vmem:[%s252 + $0x40] sm:$0xff] %v450
        %463 = vst [vmem:[%s252 + $0x48] sm:$0xff] %v451
        %464 = vst [vmem:[%s252 + $0x50] sm:$0xff] %v452
        %465 = vst [vmem:[%s252 + $0x58] sm:$0xff] %v453
        %v466 = vsub.f32 %v256, %v442
        %v467 = vsub.f32 %v257, %v443
        %v468 = vsub.f32 %v258, %v444
        %v469 = vsub.f32 %v259, %v445
        %v470 = vsub.f32 %v260, %v446
        %v471 = vsub.f32 %v261, %v447
        %v472 = vsub.f32 %v262, %v448
        %v473 = vsub.f32 %v263, %v449
        %v474 = vsub.f32 %v264, %v450
        %v475 = vsub.f32 %v265, %v451
        %v476 = vsub.f32 %v266, %v452
        %v477 = vsub.f32 %v267, %v453
        %478 = vst [vmem:[%s245] sm:$0xff] %v466
        %479 = vst [vmem:[%s245 + $0x8] sm:$0xff] %v467
        %480 = vst [vmem:[%s245 + $0x10] sm:$0xff] %v468
        %481 = vst [vmem:[%s245 + $0x18] sm:$0xff] %v469
        %482 = vst [vmem:[%s245 + $0x20] sm:$0xff] %v470
        %483 = vst [vmem:[%s245 + $0x28] sm:$0xff] %v471
        %484 = vst [vmem:[%s245 + $0x30] sm:$0xff] %v472
        %485 = vst [vmem:[%s245 + $0x38] sm:$0xff] %v473
        %486 = vst [vmem:[%s245 + $0x40] sm:$0xff] %v474
        %487 = vst [vmem:[%s245 + $0x48] sm:$0xff] %v475
        %488 = vst [vmem:[%s245 + $0x50] sm:$0xff] %v476
        %489 = vst [vmem:[%s245 + $0x58] sm:$0xff] %v477
        %s490 = sand.u32 %s110, 1
        %s491 = scalar_lea.sflag [#allocation4], %s490
        %s492 = sand.u32 %s110, 1
        %s493 = smul.addr %s492, 96
        %s494 = scalar_lea.vmem [#allocation7], %s493
        %s495 = sand.u32 %s140, 1
        %s496 = scalar_lea.sflag [#allocation9], %s495
        %s497 = sand.u32 %s140, 1
        %s498 = smul.addr %s497, 96
        %s499 = scalar_lea.vmem [#allocation8], %s498
        // Predicated region
        $region37: #{tpu_custom_call.1} parent=27 // pred_check
          %p500 = pneg %p120
        $region38: #{tpu_custom_call.1} parent=27 // pred_check_branch
          %502 = sbr.rel (%p500) target = $region40
        $region39: #{tpu_custom_call.1} parent=27 // pred_region
          %s503 = smul.u32 12, %s32
          %s505 = ssub.s32 1536, 1536
          %506 = vsyncadd %s491, %s505
          %s507 = sadd.s32 %s31, %s503
          %s508 = smul.addr %s30, 12
          %s509 = sadd.s32 %s507, %s508
          %s510 = smul.addr %s509, 128
          %s511 = scalar_lea.hbm %s2, %s510
          %s512 = sshll.u32 %s494, 4
          %s513 = int_to_ptr.vmem [resolvable:$true] %s512
          %518 = dma.vmem_to_hbm [thread:$0]  %s513, 1536, %s511, %s491, 128, 128, 8
        $region40: #{tpu_custom_call.1} parent=27 // pred_fallthru
          _
        // Predicated region
        $region41: #{tpu_custom_call.1} parent=27 // pred_check
          %p519 = pneg %p150
        $region42: #{tpu_custom_call.1} parent=27 // pred_check_branch
          %521 = sbr.rel (%p519) target = $region44
        $region43: #{tpu_custom_call.1} parent=27 // pred_region
          %s522 = smul.u32 12, %s32
          %s524 = ssub.s32 1536, 1536
          %525 = vsyncadd %s496, %s524
          %s526 = sadd.s32 %s31, %s522
          %s527 = smul.addr %s30, 12
          %s528 = sadd.s32 %s526, %s527
          %s529 = smul.addr %s528, 128
          %s530 = scalar_lea.hbm %s3, %s529
          %s531 = sshll.u32 %s499, 4
          %s532 = int_to_ptr.vmem [resolvable:$true] %s531
          %537 = dma.vmem_to_hbm [thread:$0]  %s532, 1536, %s530, %s496, 128, 128, 8
        $region44: #{tpu_custom_call.1} parent=27 // pred_fallthru
          _
      $region28: #{tpu_custom_call.1} parent=5 // pred_fallthru
        _
      %p538 = scmp.le.s32.totalorder 2, %s20
      // Predicated region
      $region45: #{tpu_custom_call.1} parent=5 // pred_check
        %p539 = pneg %p538
      $region46: #{tpu_custom_call.1} parent=5 // pred_check_branch
        %541 = sbr.rel (%p539) target = $region48
      $region47: #{tpu_custom_call.1} parent=5 // pred_region
        %s542 = ssub.s32 %s20, 2
        // Predicated region
        $region49: #{tpu_custom_call.1} parent=47 // pred_check
          %p543 = pneg %p126
        $region50: #{tpu_custom_call.1} parent=47 // pred_check_branch
          %545 = sbr.rel (%p543) target = $region52
        $region51: #{tpu_custom_call.1} parent=47 // pred_region
          %s546 = sand.u32 %s111, 1
          %s547 = scalar_lea.sflag [#allocation4], %s546
          %s548 = sand.u32 %s111, 1
          %s549 = smul.addr %s548, 96
          %s550 = scalar_lea.vmem [#allocation7], %s549
          %551 = dma.done %s547, 1536
        $region52: #{tpu_custom_call.1} parent=47 // pred_fallthru
          _
        // Predicated region
        $region53: #{tpu_custom_call.1} parent=47 // pred_check
          %p552 = pneg %p156
        $region54: #{tpu_custom_call.1} parent=47 // pred_check_branch
          %554 = sbr.rel (%p552) target = $region56
        $region55: #{tpu_custom_call.1} parent=47 // pred_region
          %s555 = sand.u32 %s141, 1
          %s556 = scalar_lea.sflag [#allocation9], %s555
          %s557 = sand.u32 %s141, 1
          %s558 = smul.addr %s557, 96
          %s559 = scalar_lea.vmem [#allocation8], %s558
          %560 = dma.done %s556, 1536
        $region56: #{tpu_custom_call.1} parent=47 // pred_fallthru
          _
      $region48: #{tpu_custom_call.1} parent=5 // pred_fallthru
        _
    $region6: #{tpu_custom_call.1} parent=1 // loop_footer
      %s24 = sadd.s32 1, %s20
    $region7: #{tpu_custom_call.1} parent=1 // loop_footer_branch
      %19 = sbr.rel target = $region3
    $region8: #{tpu_custom_call.1} parent=1 // loop_exit
      _
    %561 = vsyncpa [#allocation3], 1
    %s562 = scalar_lea.sflag [#allocation3], 1
    %563 = vsyncpa %s562, 1
    %564 = vsyncpa [#allocation6], 1
    %s565 = scalar_lea.sflag [#allocation6], 1
    %566 = vsyncpa %s565, 1
    %567 = vsyncpa [#allocation4], 1
    %s568 = scalar_lea.sflag [#allocation4], 1
    %569 = vsyncpa %s568, 1
    %570 = vsyncpa [#allocation9], 1
    %s571 = scalar_lea.sflag [#allocation9], 1
    %572 = vsyncpa %s571, 1

</llo_original>
